<compile_context>
chip_gen: v5e
topology: v5e:2x2
jax: 0.10.0
libtpu: 0.0.40
codegen_flags: <defaults>
</compile_context>

<pallas_src>
import functools
import math

import jax
import jax.numpy as jnp
import numpy as np
from jax.experimental import pallas as pl
from jax.experimental.pallas import tpu as pltpu


def _round_up(x, m):
    return ((x + m - 1) // m) * m


def _budgets():
    """(target_tile_bytes, vmem_limit_bytes), chosen per chip generation."""
    try:
        cap = getattr(pltpu.get_tpu_info(), "vmem_capacity_bytes", None)
    except Exception:  # conservative fallback if the query is unavailable
        cap = None
    if cap is not None and cap >= 100 * 1024 * 1024:      # v5e / v6e: 128 MiB VMEM
        return 8 * 1024 * 1024, 96 * 1024 * 1024
    return 4 * 1024 * 1024, 48 * 1024 * 1024              # v7x-safe: 64 MiB VMEM


def _choose_row_tile(nd_rows, cd, itemsize, target_bytes):
    # Byte target drives the tile; real element size (bf16 -> 2) so bf16 tiles
    # carry twice the rows for the same VMEM.  Keep rows a multiple of 8.
    bytes_per_row = cd * int(itemsize)
    tn = max(8, (target_bytes // bytes_per_row) // 8 * 8)
    return int(min(tn, _round_up(nd_rows, 8)))


# --------------------------- in-kernel helpers -------------------------------


def _fold_scale_shift(s, q, w, b, *, k, chans, n, eps):
    # s, q: [1, Cd] per-lane sum / sum-of-squares.  Fold the k lane groups so
    # every lane holds its channel's total: sum of k circular lane rotations
    # (XLU work, essentially free inside a memory-bound loop).
    s_tot, q_tot = s, q
    for g in range(1, k):
        s_tot = s_tot + pltpu.roll(s, shift=g * chans, axis=1)
        q_tot = q_tot + pltpu.roll(q, shift=g * chans, axis=1)
    inv_n = 1.0 / float(n)
    mean = s_tot * inv_n
    var = jnp.maximum(q_tot * inv_n - mean * mean, 0.0)    # biased (training) var
    scale = w * jax.lax.rsqrt(var + eps)                   # affine stays f32
    shift = b - mean * scale
    return scale, shift


# --------------------------- kernels ------------------------------------------


def _stats_kernel(x_ref, sum_ref, sq_ref, *, tail_rows):
    # x_ref: [tn, Cd].  sum_ref, sq_ref: [1, 1, Cd] resident f32 accumulators
    # (one row per "parallel" core split).  tail_rows (trace-time int or None)
    # is the number of valid rows in the very last block.
    ci = pl.program_id(0)
    i = pl.program_id(1)

    @pl.when(i == 0)
    def _():
        sum_ref[...] = jnp.zeros_like(sum_ref)
        sq_ref[...] = jnp.zeros_like(sq_ref)

    def accum(x):
        sum_ref[...] += jnp.sum(x, axis=0, keepdims=True)[None]
        sq_ref[...] += jnp.sum(x * x, axis=0, keepdims=True)[None]

    if tail_rows is None:
        accum(x_ref[...].astype(jnp.float32))
    else:
        is_last = jnp.logical_and(ci == pl.num_programs(0) - 1,
                                  i == pl.num_programs(1) - 1)

        @pl.when(is_last)
        def _():
            rows = jax.lax.broadcasted_iota(jnp.int32, x_ref.shape, 0)
            x = jnp.where(rows < tail_rows, x_ref[...].astype(jnp.float32), 0.0)
            accum(x)

        @pl.when(jnp.logical_not(is_last))
        def _():
            accum(x_ref[...].astype(jnp.float32))


def _normalize_kernel(x_ref, sum_ref, sq_ref, w_ref, b_ref, o_ref,
                      *, k, chans, n, eps):
    # Fold per-core partials, then the k lane groups, then fused y = x*scale+shift.
    s = jnp.sum(sum_ref[...], axis=0)          # (split, 1, Cd) -> (1, Cd)
    q = jnp.sum(sq_ref[...], axis=0)
    scale, shift = _fold_scale_shift(s, q, w_ref[...], b_ref[...],
                                     k=k, chans=chans, n=n, eps=eps)
    xf = x_ref[...].astype(jnp.float32)        # f32 math, cast only on the store
    o_ref[...] = (xf * scale + shift).astype(o_ref.dtype)


def _fused_kernel(x_ref, w_ref, b_ref, o_ref, *, k, chans, n, eps):
    # Resident fast path: whole (densified) array in one VMEM block.
    xf = x_ref[...].astype(jnp.float32)
    s = jnp.sum(xf, axis=0, keepdims=True)
    q = jnp.sum(xf * xf, axis=0, keepdims=True)
    scale, shift = _fold_scale_shift(s, q, w_ref[...], b_ref[...],
                                     k=k, chans=chans, n=n, eps=eps)
    o_ref[...] = (xf * scale + shift).astype(o_ref.dtype)


# --------------------------- wrapper ------------------------------------------


def batch_norm_1d_tbc(x, weight, bias, eps=1e-5):
    """Training-mode BatchNorm1d over the channel axis: x [T, B, C] -> [T, B, C]."""
    # TODO(synk): eval-mode (running-stats) normalization and the running
    # mean/var buffer updates are training-state side effects not modeled here.
    T, B, C = x.shape
    N = T * B
    itemsize = int(jnp.dtype(x.dtype).itemsize)

    # Lane densification: view [N, C] as [N/k, k*C] so the last dim of every
    # block / store is a multiple of 128 (unmasked lane-dense vst).
    k = 128 // math.gcd(C, 128) if C % 128 != 0 else 1
    if k > 16:                      # pathological C (e.g. odd): stay lane-sparse
        k = 1
    Cd = k * C

    Nd = -(-N // k)                 # cdiv(N, k)
    pad_rows = Nd * k - N           # < k; only non-zero when k does not divide N
    x2 = x.reshape(N, C)
    if pad_rows:
        # Zero rows add nothing to sum / sum-of-squares; we divide by true N.
        x2 = jnp.pad(x2, ((0, pad_rows), (0, 0)))
    xd = x2.reshape(Nd, Cd)

    # Tiny [Cd] affine params (off the stats critical path).
    w_d = jnp.tile(weight.astype(jnp.float32), k).reshape(1, Cd)
    b_d = jnp.tile(bias.astype(jnp.float32), k).reshape(1, Cd)

    target_tile_bytes, vmem_limit = _budgets()
    dense_bytes = Nd * Cd * itemsize

    if dense_bytes <= target_tile_bytes:
        # ---- Resident fast path: one fused kernel, 2 HBM passes, 1 dispatch --
        yd = pl.pallas_call(
            functools.partial(_fused_kernel, k=k, chans=C, n=N, eps=eps),
            out_shape=jax.ShapeDtypeStruct((Nd, Cd), x.dtype),
            grid=(1,),
            in_specs=[pl.BlockSpec((Nd, Cd), lambda i: (0, 0)),
                      pl.BlockSpec((1, Cd), lambda i: (0, 0)),
                      pl.BlockSpec((1, Cd), lambda i: (0, 0))],
            out_specs=pl.BlockSpec((Nd, Cd), lambda i: (0, 0)),
            compiler_params=pltpu.CompilerParams(vmem_limit_bytes=vmem_limit),
            cost_estimate=pl.CostEstimate(
                flops=5 * Nd * Cd, transcendentals=Cd,
                bytes_accessed=2 * dense_bytes),
        )(xd, w_d, b_d)
    else:
        # ---- Streaming path: stats sweep + fused normalize sweep -------------
        tn = _choose_row_tile(Nd, Cd, itemsize, target_tile_bytes)
        nblocks = -(-Nd // tn)
        # Split the stats sweep across v7x's two TensorCores when the block
        # count divides evenly (leading "parallel" grid axis); serial & harmless
        # on v5e/v6e's single core.
        split = 2 if (nblocks >= 2 and nblocks % 2 == 0) else 1
        steps = nblocks // split
        tail = Nd - (nblocks - 1) * tn              # rows valid in the last block
        tail_rows = None if tail == tn else tail

        sum_d, sq_d = pl.pallas_call(
            functools.partial(_stats_kernel, tail_rows=tail_rows),
            out_shape=(jax.ShapeDtypeStruct((split, 1, Cd), jnp.float32),
                       jax.ShapeDtypeStruct((split, 1, Cd), jnp.float32)),
            grid_spec=pltpu.PrefetchScalarGridSpec(
                num_scalar_prefetch=0,
                grid=(split, steps),
                in_specs=[pl.BlockSpec((tn, Cd),
                                       lambda ci, i: (ci * steps + i, 0))],
                out_specs=(pl.BlockSpec((1, 1, Cd), lambda ci, i: (ci, 0, 0)),
                           pl.BlockSpec((1, 1, Cd), lambda ci, i: (ci, 0, 0)))),
            compiler_params=pltpu.CompilerParams(
                dimension_semantics=("parallel", "arbitrary"),
                vmem_limit_bytes=vmem_limit),
            cost_estimate=pl.CostEstimate(
                flops=3 * Nd * Cd, transcendentals=0,
                bytes_accessed=dense_bytes + 2 * split * Cd * 4),
        )(xd)

        yd = pl.pallas_call(
            functools.partial(_normalize_kernel, k=k, chans=C, n=N, eps=eps),
            out_shape=jax.ShapeDtypeStruct((Nd, Cd), x.dtype),
            grid_spec=pltpu.PrefetchScalarGridSpec(
                num_scalar_prefetch=0,
                grid=(nblocks,),
                in_specs=[pl.BlockSpec((tn, Cd), lambda i: (i, 0)),
                          pl.BlockSpec((split, 1, Cd), lambda i: (0, 0, 0)),
                          pl.BlockSpec((split, 1, Cd), lambda i: (0, 0, 0)),
                          pl.BlockSpec((1, Cd), lambda i: (0, 0)),
                          pl.BlockSpec((1, Cd), lambda i: (0, 0))],
                out_specs=pl.BlockSpec((tn, Cd), lambda i: (i, 0))),
            compiler_params=pltpu.CompilerParams(
                dimension_semantics=("parallel",),       # megacore-shardable
                vmem_limit_bytes=vmem_limit),
            cost_estimate=pl.CostEstimate(
                flops=2 * Nd * Cd, transcendentals=Cd,
                bytes_accessed=2 * dense_bytes + 2 * split * Cd * 4 + 2 * Cd * 4),
        )(xd, sum_d, sq_d, w_d, b_d)

    y2 = yd.reshape(Nd * k, C)
    if pad_rows:
        y2 = y2[:N]
    return y2.reshape(T, B, C)


# --------------------------- reference & test ----------------------------------


def _reference(x, weight, bias, eps=1e-5):
    # Pure-JAX reference of training-mode BatchNorm1d applied over [T, B, C].
    xf = x.astype(jnp.float32)
    mean = jnp.mean(xf, axis=(0, 1), keepdims=True)
    var = jnp.mean((xf - mean) ** 2, axis=(0, 1), keepdims=True)
    y = (xf - mean) * jax.lax.rsqrt(var + eps)
    return (y * weight.reshape(1, 1, -1) + bias.reshape(1, 1, -1)).astype(x.dtype)


def _run_case(key, T, B, C, rtol, atol):
    kx, kw, kb = jax.random.split(key, 3)
    x = jax.random.normal(kx, (T, B, C), dtype=jnp.float32)
    # nn.BatchNorm1d default init is weight=1, bias=0; use deterministic
    # non-trivial values so the affine path is exercised.
    weight = 1.0 + 0.1 * jax.random.normal(kw, (C,), dtype=jnp.float32)
    bias = 0.1 * jax.random.normal(kb, (C,), dtype=jnp.float32)

    out = jax.block_until_ready(batch_norm_1d_tbc(x, weight, bias))
    ref = _reference(x, weight, bias)
    assert out.shape == (T, B, C)
    np.testing.assert_allclose(np.asarray(out), np.asarray(ref), rtol=rtol, atol=atol)


if __name__ == "__main__":
    key = jax.random.PRNGKey(0)
    k1, k2 = jax.random.split(key)
    # Small shape implied by the module (seq=8, batch=2, channels=32):
    # exercises the lane-densified resident fast path.
    _run_case(k1, 8, 2, 32, rtol=1e-5, atol=1e-5)
    # Larger shape to exercise the streaming two-pass path (ragged last tile,
    # per-core stats partials, in-kernel scale/shift fold).
    _run_case(k2, 1024, 8, 384, rtol=1e-4, atol=1e-4)
    print("KERNEL_OK")
</pallas_src>

<mosaic_0001>
module attributes {stable_mosaic.version = 11 : i64} {
  func.func @_fused_kernel(%arg0: i32, %arg1: memref<4x128xf32, #tpu.memory_space<vmem>>, %arg2: memref<1x128xf32, #tpu.memory_space<vmem>>, %arg3: memref<1x128xf32, #tpu.memory_space<vmem>>, %arg4: memref<4x128xf32, #tpu.memory_space<vmem>>) attributes {dimension_semantics = [#tpu.dimension_semantics<arbitrary>], iteration_bounds = array<i64: 1>, scalar_prefetch = 0 : i64, scratch_operands = 0 : i64, tpu.core_type = #tpu.core_type<tc>, window_params = [{pipeline_mode = #tpu.pipeline_mode<synchronous>, transform_indices = @transform_0, window_bounds = array<i64: 4, 128>}, {pipeline_mode = #tpu.pipeline_mode<synchronous>, transform_indices = @transform_1, window_bounds = array<i64: 1, 128>}, {pipeline_mode = #tpu.pipeline_mode<synchronous>, transform_indices = @transform_2, window_bounds = array<i64: 1, 128>}, {pipeline_mode = #tpu.pipeline_mode<synchronous>, transform_indices = @transform_3, window_bounds = array<i64: 4, 128>}]} {
    %c0 = arith.constant 0 : index
    %c0_0 = arith.constant 0 : index
    %0 = vector.load %arg1[%c0, %c0_0] : memref<4x128xf32, #tpu.memory_space<vmem>>, vector<4x128xf32>
    %cst = arith.constant dense<0.000000e+00> : vector<128xf32>
    %1 = vector.multi_reduction <add>, %0, %cst [0] : vector<4x128xf32> to vector<128xf32>
    %2 = vector.shape_cast %1 : vector<128xf32> to vector<1x128xf32>
    %3 = arith.mulf %0, %0 : vector<4x128xf32>
    %cst_1 = arith.constant dense<0.000000e+00> : vector<128xf32>
    %4 = vector.multi_reduction <add>, %3, %cst_1 [0] : vector<4x128xf32> to vector<128xf32>
    %5 = vector.shape_cast %4 : vector<128xf32> to vector<1x128xf32>
    %c0_2 = arith.constant 0 : index
    %c0_3 = arith.constant 0 : index
    %6 = vector.load %arg2[%c0_2, %c0_3] : memref<1x128xf32, #tpu.memory_space<vmem>>, vector<1x128xf32>
    %c0_4 = arith.constant 0 : index
    %c0_5 = arith.constant 0 : index
    %7 = vector.load %arg3[%c0_4, %c0_5] : memref<1x128xf32, #tpu.memory_space<vmem>>, vector<1x128xf32>
    %c32_i32 = arith.constant 32 : i32
    %8 = tpu.dynamic_rotate %2 by %c32_i32 dim 1 : vector<1x128xf32>, i32 -> vector<1x128xf32>
    %9 = arith.addf %2, %8 : vector<1x128xf32>
    %c32_i32_6 = arith.constant 32 : i32
    %10 = tpu.dynamic_rotate %5 by %c32_i32_6 dim 1 : vector<1x128xf32>, i32 -> vector<1x128xf32>
    %11 = arith.addf %5, %10 : vector<1x128xf32>
    %c64_i32 = arith.constant 64 : i32
    %12 = tpu.dynamic_rotate %2 by %c64_i32 dim 1 : vector<1x128xf32>, i32 -> vector<1x128xf32>
    %13 = arith.addf %9, %12 : vector<1x128xf32>
    %c64_i32_7 = arith.constant 64 : i32
    %14 = tpu.dynamic_rotate %5 by %c64_i32_7 dim 1 : vector<1x128xf32>, i32 -> vector<1x128xf32>
    %15 = arith.addf %11, %14 : vector<1x128xf32>
    %c96_i32 = arith.constant 96 : i32
    %16 = tpu.dynamic_rotate %2 by %c96_i32 dim 1 : vector<1x128xf32>, i32 -> vector<1x128xf32>
    %17 = arith.addf %13, %16 : vector<1x128xf32>
    %c96_i32_8 = arith.constant 96 : i32
    %18 = tpu.dynamic_rotate %5 by %c96_i32_8 dim 1 : vector<1x128xf32>, i32 -> vector<1x128xf32>
    %19 = arith.addf %15, %18 : vector<1x128xf32>
    %cst_9 = arith.constant 6.250000e-02 : f32
    %20 = vector.broadcast %cst_9 : f32 to vector<1x128xf32>
    %21 = arith.mulf %17, %20 : vector<1x128xf32>
    %cst_10 = arith.constant 6.250000e-02 : f32
    %22 = vector.broadcast %cst_10 : f32 to vector<1x128xf32>
    %23 = arith.mulf %19, %22 : vector<1x128xf32>
    %24 = arith.mulf %21, %21 : vector<1x128xf32>
    %25 = arith.subf %23, %24 : vector<1x128xf32>
    %cst_11 = arith.constant 0.000000e+00 : f32
    %26 = vector.broadcast %cst_11 : f32 to vector<1x128xf32>
    %27 = arith.maximumf %25, %26 : vector<1x128xf32>
    %cst_12 = arith.constant 9.99999974E-6 : f32
    %28 = vector.broadcast %cst_12 : f32 to vector<1x128xf32>
    %29 = arith.addf %27, %28 : vector<1x128xf32>
    %30 = math.rsqrt %29 : vector<1x128xf32>
    %31 = arith.mulf %6, %30 : vector<1x128xf32>
    %32 = arith.mulf %21, %31 : vector<1x128xf32>
    %33 = arith.subf %7, %32 : vector<1x128xf32>
    %34 = vector.broadcast %31 : vector<1x128xf32> to vector<4x128xf32>
    %35 = arith.mulf %0, %34 : vector<4x128xf32>
    %36 = vector.broadcast %33 : vector<1x128xf32> to vector<4x128xf32>
    %37 = arith.addf %35, %36 : vector<4x128xf32>
    %c0_13 = arith.constant 0 : index
    %c0_14 = arith.constant 0 : index
    %38 = vector.load %arg4[%c0_13, %c0_14] : memref<4x128xf32, #tpu.memory_space<vmem>>, vector<4x128xf32>
    tpu.vector_store %arg4[%c0_13, %c0_14], %37 {strides = array<i32>} : memref<4x128xf32, #tpu.memory_space<vmem>>, vector<4x128xf32>,
    return
  }
  func.func @transform_0(%arg0: i32) -> (i32, i32) {
    %c0_i32 = arith.constant 0 : i32
    %c0_i32_0 = arith.constant 0 : i32
    %c0_i32_1 = arith.constant 0 : i32
    return %c0_i32, %c0_i32_0 : i32, i32
  }
  func.func @transform_1(%arg0: i32) -> (i32, i32) {
    %c0_i32 = arith.constant 0 : i32
    %c0_i32_0 = arith.constant 0 : i32
    %c0_i32_1 = arith.constant 0 : i32
    return %c0_i32, %c0_i32_0 : i32, i32
  }
  func.func @transform_2(%arg0: i32) -> (i32, i32) {
    %c0_i32 = arith.constant 0 : i32
    %c0_i32_0 = arith.constant 0 : i32
    %c0_i32_1 = arith.constant 0 : i32
    return %c0_i32, %c0_i32_0 : i32, i32
  }
  func.func @transform_3(%arg0: i32) -> (i32, i32) {
    %c0_i32 = arith.constant 0 : i32
    %c0_i32_0 = arith.constant 0 : i32
    %c0_i32_1 = arith.constant 0 : i32
    return %c0_i32, %c0_i32_0 : i32, i32
  }
}

</mosaic_0001>

<llo_original>
// kernel: tpu_custom_call.1
$region0: #{tpu_custom_call.1}
  #allocation0 [shape = 'u32[]', space=smem, size = 0x4, offset = 0x4, fixed_abs, tag = 'smem constant byte address 0x4 - core index']
  #allocation1 [shape = 'u32[72,128]{1,0:T(1,128)}', space=vmem, size = 0x9000, scoped, tag = 'internal scratch']
  %s0 = inlined_call_operand.hbm [shape: f32[4,128], index: 0, kind: input, shape index: {}]
  %s1 = inlined_call_operand.hbm [shape: f32[1,128], index: 1, kind: input, shape index: {}]
  %s2 = inlined_call_operand.vmem [shape: f32[1,128], index: 2, kind: input, shape index: {}]
  %s3 = inlined_call_operand.hbm [shape: f32[4,128], index: 3, kind: output, shape index: {}]
  %s4 = sld [smem:[#allocation0]]
  $region30: #{tpu_custom_call.1} parent=0
    _
  %s6 = ssub.s32 1, %s4
  %s7 = scalar_select 0, %s6, %s4
  $region1: #{tpu_custom_call.1} parent=0
    #allocation2 [shape = 'u8[2048]{0}', space=vmem, size = 0x800, scoped, tag = 'input window, operand 0, single buffered']
    #allocation3 [shape = 's32[1]{0}', space=sflag, size = 0x4, scoped, tag = 'scoped memory for tpu_custom_call.1']
    #allocation4 [shape = 's32[1]{0}', space=sflag, size = 0x4, scoped, tag = 'scoped memory for tpu_custom_call.1']
    #allocation5 [shape = 'u8[512]{0}', space=vmem, size = 0x400, scoped, tag = 'input window, operand 1, single buffered']
    #allocation6 [shape = 's32[1]{0}', space=sflag, size = 0x4, scoped, tag = 'scoped memory for tpu_custom_call.1']
    #allocation7 [shape = 'u8[2048]{0}', space=vmem, size = 0x800, scoped, tag = 'output window, operand 0, single buffered']
    %8 = vsyncpa [#allocation3], 0
    %9 = vsyncpa [#allocation6], 0
    %10 = vsyncpa [#allocation4], 0
    // Predicated region
    $region2: #{tpu_custom_call.1} parent=1 // pred_check
      _
    $region3: #{tpu_custom_call.1} parent=1 // pred_check_branch
      %12 = sbr.rel (0) target = $region5
    $region4: #{tpu_custom_call.1} parent=1 // pred_region
      %14 = vsyncadd [#allocation3], 0
      %s16 = sshll.u32 %s0, 4
      %s17 = int_to_ptr.hbm [resolvable:$true] %s16
      %s18 = sshll.u32 [#allocation2], 4
      %s19 = int_to_ptr.vmem [resolvable:$true] %s18
      %21 = dma.hbm_to_vmem [thread:$0]  %s17, 64, %s19, [#allocation3]
    $region5: #{tpu_custom_call.1} parent=1 // pred_fallthru
      _
    // Predicated region
    $region6: #{tpu_custom_call.1} parent=1 // pred_check
      _
    $region7: #{tpu_custom_call.1} parent=1 // pred_check_branch
      %23 = sbr.rel (0) target = $region9
    $region8: #{tpu_custom_call.1} parent=1 // pred_region
      %25 = vsyncadd [#allocation6], 0
      %s27 = sshll.u32 %s1, 4
      %s28 = int_to_ptr.hbm [resolvable:$true] %s27
      %s29 = sshll.u32 [#allocation5], 4
      %s30 = int_to_ptr.vmem [resolvable:$true] %s29
      %32 = dma.hbm_to_vmem [thread:$0]  %s28, 16, %s30, [#allocation6]
    $region9: #{tpu_custom_call.1} parent=1 // pred_fallthru
      _
    // Predicated region
    $region10: #{tpu_custom_call.1} parent=1 // pred_check
      _
    $region11: #{tpu_custom_call.1} parent=1 // pred_check_branch
      %34 = sbr.rel (0) target = $region13
    $region12: #{tpu_custom_call.1} parent=1 // pred_region
      _
    $region13: #{tpu_custom_call.1} parent=1 // pred_fallthru
      _
    // Predicated region
    $region14: #{tpu_custom_call.1} parent=1 // pred_check
      _
    $region15: #{tpu_custom_call.1} parent=1 // pred_check_branch
      %36 = sbr.rel (0) target = $region17
    $region16: #{tpu_custom_call.1} parent=1 // pred_region
      %38 = dma.done [#allocation3], 64
    $region17: #{tpu_custom_call.1} parent=1 // pred_fallthru
      _
    // Predicated region
    $region18: #{tpu_custom_call.1} parent=1 // pred_check
      _
    $region19: #{tpu_custom_call.1} parent=1 // pred_check_branch
      %40 = sbr.rel (0) target = $region21
    $region20: #{tpu_custom_call.1} parent=1 // pred_region
      %42 = dma.done [#allocation6], 16
    $region21: #{tpu_custom_call.1} parent=1 // pred_fallthru
      _
    %v43 = vld [vmem:[#allocation2] sm:$0xf]
    %vm44 = vcmask 1043456
    %v45 = vsel %vm44, %v43, 0.0
    %v46 = vrot.slane %v45, 4
    %v47 = vadd.f32 %v45, %v46
    %v48 = vrot.slane %v47, 2
    %v49 = vadd.f32 %v47, %v48
    %v50 = vrot.slane %v49, 1
    %v51 = vadd.f32 %v49, %v50
    %v52 = vmul.f32 %v43, %v43
    %v53 = vsel %vm44, %v52, 0.0
    %v54 = vrot.slane %v53, 4
    %v55 = vadd.f32 %v53, %v54
    %v56 = vrot.slane %v55, 2
    %v57 = vadd.f32 %v55, %v56
    %v58 = vrot.slane %v57, 1
    %v59 = vadd.f32 %v57, %v58
    %v60 = vld [vmem:[#allocation5] sm:$0x1]
    %v61 = vld [vmem:[%s2] sm:$0x1]
    %62 = vrot.lane.b32.xlu0 %v51, 32
    %v63 = vpop.permute.xlu0 %62
    %v64 = vadd.f32 %v51, %v63
    %65 = vrot.lane.b32.xlu0 %v59, 32
    %v66 = vpop.permute.xlu0 %65
    %v67 = vadd.f32 %v59, %v66
    %68 = vrot.lane.b32.xlu0 %v51, 64
    %v69 = vpop.permute.xlu0 %68
    %v70 = vadd.f32 %v64, %v69
    %71 = vrot.lane.b32.xlu0 %v59, 64
    %v72 = vpop.permute.xlu0 %71
    %v73 = vadd.f32 %v67, %v72
    %74 = vrot.lane.b32.xlu0 %v51, 96
    %v75 = vpop.permute.xlu0 %74
    %v76 = vadd.f32 %v70, %v75
    %77 = vrot.lane.b32.xlu0 %v59, 96
    %v78 = vpop.permute.xlu0 %77
    %v79 = vadd.f32 %v73, %v78
    %v80 = vmul.f32 %v76, 0.0625
    %v81 = vmul.f32 %v79, 0.0625
    %v82 = vmul.f32 %v80, %v80
    %v83 = vsub.f32 %v81, %v82
    %v84 = vmax.f32 %v83, 0.0
    %v85 = vadd.f32 %v84, 1e-05
    %v86 = vrsqrt.pop %v85
    %v87 = vmul.f32 %v86, %v85
    %v88 = vmul.f32 %v87, %v86
    %v89 = vmul.f32 0.5, %v88
    %v90 = vsub.f32 1.5, %v89
    %v91 = vmul.f32 %v86, %v90
    %vm92 = vweird.f32 %v85
    %vm93 = vweird.f32 %v86
    %vm94 = vmor %vm92, %vm93
    %v95 = vsel %vm94, %v86, %v91
    %v96 = vmul.f32 %v60, %v95
    %v97 = vmul.f32 %v80, %v96
    %v98 = vsub.f32 %v61, %v97
    %v100 = vperm.slane %v96, 0
    %v102 = vmul.f32 %v43, %v100
    %v104 = vperm.slane %v98, 0
    %v106 = vadd.f32 %v102, %v104
    %107 = vst [vmem:[#allocation7] sm:$0xf] %v106
    // Predicated region
    $region22: #{tpu_custom_call.1} parent=1 // pred_check
      _
    $region23: #{tpu_custom_call.1} parent=1 // pred_check_branch
      %109 = sbr.rel (0) target = $region25
    $region24: #{tpu_custom_call.1} parent=1 // pred_region
      %111 = vsyncadd [#allocation4], 0
      %s113 = sshll.u32 [#allocation7], 4
      %s114 = int_to_ptr.vmem [resolvable:$true] %s113
      %s115 = sshll.u32 %s3, 4
      %s116 = int_to_ptr.hbm [resolvable:$true] %s115
      %118 = dma.vmem_to_hbm [thread:$0]  %s114, 64, %s116, [#allocation4]
    $region25: #{tpu_custom_call.1} parent=1 // pred_fallthru
      _
    // Predicated region
    $region26: #{tpu_custom_call.1} parent=1 // pred_check
      _
    $region27: #{tpu_custom_call.1} parent=1 // pred_check_branch
      %120 = sbr.rel (0) target = $region29
    $region28: #{tpu_custom_call.1} parent=1 // pred_region
      %122 = dma.done [#allocation4], 64
    $region29: #{tpu_custom_call.1} parent=1 // pred_fallthru
      _
    %123 = vsyncpa [#allocation3], 1
    %124 = vsyncpa [#allocation6], 1
    %125 = vsyncpa [#allocation4], 1

</llo_original>
